<compile_context>
chip_gen: v7x
topology: tpu7x:2x2x1
jax: 0.10.0
libtpu: 0.0.40
codegen_flags: <defaults>
</compile_context>

<pallas_src>
import functools
import math

import jax
import jax.numpy as jnp
from jax.experimental import pallas as pl
from jax.experimental.pallas import tpu as pltpu


_LANE = 128
_MAX_LANE_W = 16384            # cap on slab lane width (128 lanes * 128)
_MAX_COPY_CHUNKS = 4           # in-flight HBM->HBM DMAs for large copies
_MIN_CHUNK_BYTES = 1 << 20     # don't split copies smaller than ~1 MiB


def _sublane_pack(dtype):
    # 8 sublanes for 32-bit, 16 for bf16, 32 for int8/fp8.
    itemsize = jnp.dtype(dtype).itemsize
    return 8 * max(1, 4 // max(1, itemsize))


def _resolve_shape(per_batch_elems, shape):
    """Resolve a possible -1 wildcard, PyTorch-view style, and validate."""
    shape = tuple(int(d) for d in shape)
    if shape.count(-1) > 1:
        raise ValueError("only one dimension can be -1")
    if -1 in shape:
        known = math.prod(d for d in shape if d != -1)
        if known == 0 or per_batch_elems % known:
            raise ValueError(
                f"cannot view {per_batch_elems} elements as {shape}")
        shape = tuple(per_batch_elems // known if d == -1 else d for d in shape)
    if math.prod(shape) != per_batch_elems:
        raise ValueError(f"cannot view {per_batch_elems} elements as {shape}")
    return shape


def _pick_slab(total, dtype):
    """Lane-dense 2-D slab (rows, lane_w) for a flat array of `total` elems.

    Prefers the widest 128-multiple divisor of `total` that still leaves at
    least one full sublane pack of rows (keeps the slab dense on both axes).
    Only called when total % 128 == 0.
    """
    sub = _sublane_pack(dtype)
    max_k = min(_MAX_LANE_W // _LANE, total // _LANE)
    lane_w = None
    widest = None
    for k in range(max_k, 0, -1):
        if total % (_LANE * k):
            continue
        if widest is None:
            widest = _LANE * k
        if (total // (_LANE * k)) >= sub:
            lane_w = _LANE * k
            break
    if lane_w is None:          # tiny tensor: every divisor gives < sub rows
        lane_w = widest
    return total // lane_w, lane_w


def _chunk_rows(rows, sub, max_chunks):
    """Static (start, size) row chunks, starts aligned to the sublane pack."""
    if max_chunks <= 1 or rows <= sub:
        return ((0, rows),)
    step = max(sub, -(-rows // max_chunks))      # ceil(rows / max_chunks)
    step = -(-step // sub) * sub                 # round up to sublane pack
    chunks, start = [], 0
    while start < rows:
        size = min(step, rows - start)
        chunks.append((start, size))
        start += size
    return tuple(chunks)


def _make_hbm_copy_kernel(chunks):
    """Kernel: a few in-flight HBM->HBM DMAs covering the whole slab."""
    def kernel(x_hbm, o_hbm, sems):
        copies = []
        for i, (start, size) in enumerate(chunks):
            cp = pltpu.make_async_copy(
                x_hbm.at[pl.ds(start, size)],
                o_hbm.at[pl.ds(start, size)],
                sems.at[i])
            cp.start()
            copies.append(cp)
        for cp in copies:
            cp.wait()
    return kernel


@functools.partial(jax.jit, static_argnames=("target_shape",))
def _reshape_copy(x, target_shape):
    b = x.shape[0]
    n_in = math.prod(x.shape[1:]) if x.ndim > 1 else 1
    total = b * n_in
    out_shape = (b,) + tuple(target_shape)

    if total == 0:
        # Empty tensor: nothing to copy, metadata-only result.
        return x.reshape(out_shape)

    dtype = x.dtype
    itemsize = jnp.dtype(dtype).itemsize
    sub = _sublane_pack(dtype)

    if total % _LANE == 0:
        rows, lane_w = _pick_slab(total, dtype)
    else:
        # Ragged element count: keep the natural (batch, per-batch) slab.
        rows, lane_w = b, n_in
    x2d = x.reshape(rows, lane_w)      # metadata-only (contiguous input)

    max_chunks = _MAX_COPY_CHUNKS if total * itemsize >= _MIN_CHUNK_BYTES else 1
    chunks = _chunk_rows(rows, sub, max_chunks)

    out2d = pl.pallas_call(
        _make_hbm_copy_kernel(chunks),
        out_shape=jax.ShapeDtypeStruct((rows, lane_w), dtype),
        # Both operands stay in place (HBM): no VMEM staging, no grid, no
        # per-step pipeline overhead, no scoped-VMEM pressure on v5e/v6e/v7x.
        in_specs=[pl.BlockSpec(memory_space=pl.ANY)],
        out_specs=pl.BlockSpec(memory_space=pl.ANY),
        scratch_shapes=[pltpu.SemaphoreType.DMA((len(chunks),))],
        cost_estimate=pl.CostEstimate(
            flops=0, transcendentals=0,
            bytes_accessed=2 * total * itemsize),
    )(x2d)

    return out2d.reshape(out_shape)


def reshape_forward(x, shape):
    """Equivalent of x.view(x.size(0), *shape): metadata-only, zero HBM traffic."""
    n_in = math.prod(x.shape[1:]) if x.ndim > 1 else 1
    target = _resolve_shape(n_in, shape)
    return x.reshape((x.shape[0],) + target)


def reshape_copy_forward(x, shape):
    """Same result, materialized into a fresh buffer via the Pallas DMA kernel."""
    n_in = math.prod(x.shape[1:]) if x.ndim > 1 else 1
    target = _resolve_shape(n_in, shape)
    return _reshape_copy(x, target)


class Reshape:
    """Mirror of the PyTorch module (stateless, no parameters).

    By default the forward is metadata-only (matches torch .view cost).
    Pass materialize=True to force a fresh output buffer via the Pallas
    HBM->HBM copy kernel.
    """
    # TODO(synk): torch .view's storage aliasing has no functional-JAX
    # equivalent; the default path returns a metadata-only reshape instead.

    def __init__(self, shape, materialize=False):
        self.shape = tuple(shape)
        self.materialize = materialize

    def __call__(self, x):
        if self.materialize:
            return reshape_copy_forward(x, self.shape)
        return reshape_forward(x, self.shape)


if __name__ == "__main__":
    key = jax.random.PRNGKey(0)
    # Small NCHW input: (batch=2, channels=4, H=16, W=16) -> 1024 elems/batch.
    x = jax.random.normal(key, (2, 4, 16, 16), dtype=jnp.float32)
    ref = x.reshape(2, 8, 128)

    # Default path: metadata-only view (what the PyTorch module does).
    out_view = Reshape((8, 128))(x)
    out_view = jax.block_until_ready(out_view)
    assert out_view.shape == (2, 8, 128), out_view.shape
    assert out_view.dtype == x.dtype
    assert jnp.array_equal(out_view, ref), "view path mismatch"

    # Pallas kernel path: materialized copy into a fresh buffer.
    out_copy = Reshape((8, 128), materialize=True)(x)
    out_copy = jax.block_until_ready(out_copy)
    assert out_copy.shape == (2, 8, 128), out_copy.shape
    assert out_copy.dtype == x.dtype
    assert jnp.array_equal(out_copy, ref), "copy-kernel mismatch"

    # Ragged per-batch element count (105, not a multiple of 128).
    x2 = jax.random.normal(jax.random.PRNGKey(0), (2, 3, 5, 7), dtype=jnp.float32)
    out2 = Reshape((105,), materialize=True)(x2)
    out2 = jax.block_until_ready(out2)
    assert jnp.array_equal(out2, x2.reshape(2, 105)), "ragged copy mismatch"

    print("KERNEL_OK")
</pallas_src>

<mosaic_0001>
module attributes {stable_mosaic.version = 11 : i64} {
  func.func @kernel(%arg0: memref<8x256xf32, #tpu.memory_space<any>>, %arg1: memref<8x256xf32, #tpu.memory_space<any>>, %arg2: memref<1x!tpu.dma_semaphore, #tpu.memory_space<semaphore_mem>>) attributes {dimension_semantics = [], scalar_prefetch = 0 : i64, scratch_operands = 1 : i64, tpu.core_type = #tpu.core_type<tc>} {
    %c0_i32 = arith.constant 0 : i32
    %c0_i32_0 = arith.constant 0 : i32
    %c0_i32_1 = arith.constant 0 : i32
    %0 = tpu.memref_slice %arg0[%c0_i32_0, %c0_i32_1] : memref<8x256xf32, #tpu.memory_space<any>> -> memref<8x256xf32, #tpu.memory_space<any>>
    %c0_i32_2 = arith.constant 0 : i32
    %c0_i32_3 = arith.constant 0 : i32
    %1 = tpu.memref_slice %arg1[%c0_i32_2, %c0_i32_3] : memref<8x256xf32, #tpu.memory_space<any>> -> memref<8x256xf32, #tpu.memory_space<any>>
    %2 = tpu.memref_slice %arg2[%c0_i32] : memref<1x!tpu.dma_semaphore, #tpu.memory_space<semaphore_mem>> -> memref<1x!tpu.dma_semaphore, #tpu.memory_space<semaphore_mem>>
    %3 = tpu.memref_squeeze %2 : memref<1x!tpu.dma_semaphore, #tpu.memory_space<semaphore_mem>> -> memref<!tpu.dma_semaphore, #tpu.memory_space<semaphore_mem>>
    tpu.enqueue_dma source(%0 : memref<8x256xf32, #tpu.memory_space<any>>) target(%1 : memref<8x256xf32, #tpu.memory_space<any>>) target_semaphore(%3 : memref<!tpu.dma_semaphore, #tpu.memory_space<semaphore_mem>>)
    %c0_i32_4 = arith.constant 0 : i32
    %c0_i32_5 = arith.constant 0 : i32
    %c0_i32_6 = arith.constant 0 : i32
    %4 = tpu.memref_slice %arg0[%c0_i32_5, %c0_i32_6] : memref<8x256xf32, #tpu.memory_space<any>> -> memref<8x256xf32, #tpu.memory_space<any>>
    %c0_i32_7 = arith.constant 0 : i32
    %c0_i32_8 = arith.constant 0 : i32
    %5 = tpu.memref_slice %arg1[%c0_i32_7, %c0_i32_8] : memref<8x256xf32, #tpu.memory_space<any>> -> memref<8x256xf32, #tpu.memory_space<any>>
    %6 = tpu.memref_slice %arg2[%c0_i32_4] : memref<1x!tpu.dma_semaphore, #tpu.memory_space<semaphore_mem>> -> memref<1x!tpu.dma_semaphore, #tpu.memory_space<semaphore_mem>>
    %7 = tpu.memref_squeeze %6 : memref<1x!tpu.dma_semaphore, #tpu.memory_space<semaphore_mem>> -> memref<!tpu.dma_semaphore, #tpu.memory_space<semaphore_mem>>
    tpu.wait_dma2 semaphore(%7 : memref<!tpu.dma_semaphore, #tpu.memory_space<semaphore_mem>>) src(%4 : memref<8x256xf32, #tpu.memory_space<any>>) dst(%5 : memref<8x256xf32, #tpu.memory_space<any>>)
    return
  }
}

</mosaic_0001>

<llo_original>
// kernel: _reshape_copy.1
$region0: #{_reshape_copy.1}
  #allocation0 [shape = 'u32[]', space=smem, size = 0x4, offset = 0x4, fixed_abs, tag = 'smem constant byte address 0x4 - core index']
  #allocation1 [shape = 'u32[144,128]{1,0:T(1,128)}', space=vmem, size = 0x12000, scoped, tag = 'internal scratch']
  #allocation2 [shape = 's32[1]{0}', space=sflag, size = 0x4, scoped, tag = 'scratch operand']
  #allocation3 [shape = 's32[]', space=sflag, size = 0x4, offset = 0, fixed_abs, tag = 'sflag constant byte address 0x0 - dummy sync flag']
  %s0 = inlined_call_operand.vmem [shape: f32[8,256], index: 0, kind: input, shape index: {}]
  %s1 = inlined_call_operand.vmem [shape: f32[8,256], index: 1, kind: output, shape index: {}]
  %s2 = sld [smem:[#allocation0]]
  $region36: #{_reshape_copy.1} parent=0
    _
  %s4 = ssub.s32 1, %s2
  %s5 = scalar_select 0, %s4, %s2
  %p7 = scmp.lt.u32.totalorder 16, 8
  %p8 = pneg %p7
  // Predicated region
  $region2: #{_reshape_copy.1} parent=0 // pred_check
    _
  $region3: #{_reshape_copy.1} parent=0 // pred_check_branch
    %10 = sbr.rel (%p7) target = $region5
  $region4: #{_reshape_copy.1} parent=0 // pred_region
    %s25 = sand.u32 16, 7
    %p26 = scmp.eq.s32.totalorder %s25, 0
    // Predicated region
    $region17: #{_reshape_copy.1} parent=4 // pred_check
      %p27 = pneg %p26
    $region18: #{_reshape_copy.1} parent=4 // pred_check_branch
      %29 = sbr.rel (%p27) target = $region20
    $region19: #{_reshape_copy.1} parent=4 // pred_region
      loop: start=0, step=1, limit=1
      $region21: #{_reshape_copy.1} parent=19 // loop_pre_header
        _
      $region22: #{_reshape_copy.1} parent=19 // loop_header
        %s31 = sphi 0, %s35
        %p32 = scmp.ge.s32.totalorder %s31, 1
        %s36 = sphi %s0, %s0
        %s37 = sphi %s1, %s1
      $region23: #{_reshape_copy.1} parent=19 // loop_header_branch
        %34 = sbr.rel (%p32) target = $region27
      $region24: #{_reshape_copy.1} parent=19 // loop_body
        %v38 = vld [vmem:[%s36] sm:$0xff]
        %39 = vst [vmem:[%s37] sm:$0xff] %v38
        %v40 = vld [vmem:[%s36 + $0x8] sm:$0xff]
        %41 = vst [vmem:[%s37 + $0x8] sm:$0xff] %v40
      $region25: #{_reshape_copy.1} parent=19 // loop_footer
        %s35 = sadd.s32 1, %s31
      $region26: #{_reshape_copy.1} parent=19 // loop_footer_branch
        %30 = sbr.rel target = $region22
      $region27: #{_reshape_copy.1} parent=19 // loop_exit
        _
    $region20: #{_reshape_copy.1} parent=4 // pred_fallthru
      _
    %p42 = pneg %p26
    // Predicated region
    $region28: #{_reshape_copy.1} parent=4 // pred_check
      _
    $region29: #{_reshape_copy.1} parent=4 // pred_check_branch
      %44 = sbr.rel (%p26) target = $region31
    $region30: #{_reshape_copy.1} parent=4 // pred_region
      %s45 = sand.u32 16, 7
    $region31: #{_reshape_copy.1} parent=4 // pred_fallthru
      _
  $region5: #{_reshape_copy.1} parent=0 // pred_fallthru
    _
  // Predicated region
  $region6: #{_reshape_copy.1} parent=0 // pred_check
    %p11 = pneg %p7
  $region7: #{_reshape_copy.1} parent=0 // pred_check_branch
    %13 = sbr.rel (%p11) target = $region9
  $region8: #{_reshape_copy.1} parent=0 // pred_region
    %s14 = sshllo.u32 0, 16
    loop: start=0, step=1, limit=1
    $region10: #{_reshape_copy.1} parent=8 // loop_pre_header
      _
    $region11: #{_reshape_copy.1} parent=8 // loop_header
      %s16 = sphi 0, %s20
      %p17 = scmp.ge.s32.totalorder %s16, 1
      %s21 = sphi %s0, %s0
      %s22 = sphi %s1, %s1
    $region12: #{_reshape_copy.1} parent=8 // loop_header_branch
      %19 = sbr.rel (%p17) target = $region16
    $region13: #{_reshape_copy.1} parent=8 // loop_body
      %v23 = vld [vmem:[%s21] sm:%s14]
      %24 = vst [vmem:[%s22] sm:%s14] %v23
    $region14: #{_reshape_copy.1} parent=8 // loop_footer
      %s20 = sadd.s32 1, %s16
    $region15: #{_reshape_copy.1} parent=8 // loop_footer_branch
      %15 = sbr.rel target = $region11
    $region16: #{_reshape_copy.1} parent=8 // loop_exit
      _
  $region9: #{_reshape_copy.1} parent=0 // pred_fallthru
    _
  // Predicated region
  $region32: #{_reshape_copy.1} parent=0 // pred_check
    _
  $region33: #{_reshape_copy.1} parent=0 // pred_check_branch
    %48 = sbr.rel (0) target = $region35
  $region34: #{_reshape_copy.1} parent=0 // pred_region
    %49 = vsyncadd [#allocation2], 256
  $region35: #{_reshape_copy.1} parent=0 // pred_fallthru
    _
  %s50 = smul.u32 8, 1
  %s51 = smul.u32 %s50, 2
  %s52 = sshll.u32 %s51, 4
  %53 = dma.done [#allocation2], %s52
  %54 = vsyncmov [#allocation2]
  %s55 = vpop.sfrf %54
  %p56 = scmp.eq.s32.totalorder %s55, 0
  %p57 = pneg %p56
  %59 = shalt.err (%p57)

</llo_original>
